<compile_context>
chip_gen: v5e
topology: v5e:2x2
jax: 0.10.0
libtpu: 0.0.40
codegen_flags: <defaults>
</compile_context>

<pallas_src>
import functools

import jax
import jax.numpy as jnp
from jax import lax
from jax.experimental import pallas as pl
from jax.experimental.pallas import tpu as pltpu


# ----------------------------- Pallas kernel --------------------------------
def _cefem_kernel(x_ref, w_top_ref, b_mask_ref, w_cc_ref, vecs_ref, border_ref,
                  out_ref, *, spatial_w):
    """Processes a block of NB images laid out as (NB, C, H*W)."""
    NB, C, HW = x_ref.shape
    W = spatial_w

    # ---- load the (tiny) packed parameters once per grid step --------------
    w_top = w_top_ref[...]                    # (2, C): [conv_mask w ; ones]
    b_mask = b_mask_ref[0, 0]                 # conv_mask bias (scalar)
    w1 = w_cc_ref[0]                          # (C, C) channel_add conv1 [out, in]
    w2 = w_cc_ref[1]                          # (C, C) channel_add conv2 [out, in]
    vecs = vecs_ref[...]                      # (C, 4): b1 | gamma | beta | b2
    b1, gamma = vecs[:, 0:1], vecs[:, 1:2]
    beta, b2 = vecs[:, 2:3], vecs[:, 3:4]

    border = border_ref[...]                  # (4, HW) 0/1 validity masks
    m_l, m_r = border[0:1, :], border[1:2, :]  # neighbor at c-1 / c+1 is valid
    m_u, m_d = border[2:3, :], border[3:4, :]  # neighbor at r-1 / r+1 is valid

    def shift_up(y):       # y(r-1, c), zero padding at r == 0
        return m_u * pltpu.roll(y, W, axis=1)

    def shift_down(y):     # y(r+1, c), zero padding at r == H-1
        return m_d * pltpu.roll(y, HW - W, axis=1)

    # NB is small and static: unrolled per-image loop inside one grid step.
    for b in range(NB):
        x = x_ref[b]                                                 # (C, HW)

        # -------- ContextBlock2d (pool='att', fusion=['channel_add']) -------
        # One MXU matmul gives the conv_mask logits (row 0) and the channel
        # sum needed by the Sobel branch (row 1).
        top = jnp.dot(w_top, x, preferred_element_type=jnp.float32)  # (2, HW)
        logits = top[0:1, :] + b_mask                                # (1, HW)
        xs = top[1:2, :]                                             # (1, HW)

        # spatial softmax over all H*W positions
        m = jnp.max(logits, axis=1, keepdims=True)                   # (1, 1)
        p = jnp.exp(logits - m)
        denom = jnp.sum(p, axis=1, keepdims=True)                    # (1, 1)
        # approx=True would use the EUP reciprocal (free slot); kept exact so
        # the 1e-4 reference tolerance is comfortably met.
        attn = p * pl.reciprocal(denom, approx=False)                # (1, HW)

        # attention-weighted pooling: (C,HW) x (1,HW)^T on the MXU -> (C, 1)
        ctx = lax.dot_general(x, attn, (((1,), (1,)), ((), ())),
                              preferred_element_type=jnp.float32)    # (C, 1)

        # channel_add_conv: Conv1x1 -> LayerNorm([C,1,1]) -> ReLU -> Conv1x1
        hidden = jnp.dot(w1, ctx, preferred_element_type=jnp.float32) + b1
        mu = jnp.mean(hidden, axis=0, keepdims=True)                 # (1, 1)
        var = jnp.mean((hidden - mu) ** 2, axis=0, keepdims=True)    # biased
        hidden = (hidden - mu) * lax.rsqrt(var + 1e-5)
        hidden = hidden * gamma + beta
        hidden = jnp.maximum(hidden, 0.0)                            # ReLU
        add_term = jnp.dot(w2, hidden, preferred_element_type=jnp.float32) + b2

        out_gc = x + add_term                                        # (C, HW)

        # -------- Sobel edge branch (separable 3x3, zero padding) -----------
        left = m_l * pltpu.roll(xs, 1, axis=1)        # xs(r, c-1)
        right = m_r * pltpu.roll(xs, HW - 1, axis=1)  # xs(r, c+1)
        dh = right - left                             # horizontal [-1, 0, 1]
        sh = left + 2.0 * xs + right                  # horizontal [ 1, 2, 1]
        gx = shift_up(dh) + 2.0 * dh + shift_down(dh)  # sobel_x output
        gy = shift_down(sh) - shift_up(sh)             # sobel_y output

        # -------- concat([gc_out, edge_out], channel) ------------------------
        out_ref[b, 0:C, :] = out_gc
        out_ref[b, C:C + 2, :] = jnp.concatenate([gx, gy], axis=0)   # (2, HW)


# ----------------------------- host-side glue -------------------------------
def context_edge_enhance(x, params):
    """x: (N, C, H, W) f32 -> (N, C+2, H, W) f32."""
    N, C, H, W = x.shape
    HW = H * W
    w_mask, b_mask, w1, b1, gamma, beta, w2, b2 = params

    # images per grid step: largest divisor of N up to 8 (amortize step cost)
    NB = 1
    for d in range(min(N, 8), 0, -1):
        if N % d == 0:
            NB = d
            break

    # lane-dense layout: flatten H, W so the minor dim is a multiple of 128
    x_flat = x.reshape(N, C, HW).astype(jnp.float32)

    # packed constants (4 arrays instead of 12 separate BlockSpecs)
    w_top = jnp.concatenate(
        [w_mask.reshape(1, C), jnp.ones((1, C), jnp.float32)], axis=0
    ).astype(jnp.float32)                                        # (2, C)
    b_mask_a = jnp.reshape(b_mask, (1, 1)).astype(jnp.float32)   # (1, 1)
    w_cc = jnp.stack([w1, w2], axis=0).astype(jnp.float32)       # (2, C, C)
    vecs = jnp.stack([b1, gamma, beta, b2], axis=1).astype(jnp.float32)  # (C,4)

    # 0/1 border-validity masks for the rolled row-major flattened layout
    idx = jnp.arange(HW, dtype=jnp.int32)
    col, row = idx % W, idx // W
    border = jnp.stack(
        [col != 0, col != W - 1, row != 0, row != H - 1], axis=0
    ).astype(jnp.float32)                                        # (4, HW)

    kernel = functools.partial(_cefem_kernel, spatial_w=W)

    # NOTE: at production FCN-ResNet50 sizes (C ~ 2048, H*W ~ 64^2+) the
    # whole-image block must be re-tiled over channels with a two-pass
    # softmax, and vmem_limit_bytes re-derived (64 MiB physical on v7x).
    out_flat = pl.pallas_call(
        kernel,
        out_shape=jax.ShapeDtypeStruct((N, C + 2, HW), jnp.float32),
        grid=(N // NB,),
        in_specs=[
            pl.BlockSpec((NB, C, HW), lambda n: (n, 0, 0)),
            pl.BlockSpec((2, C), lambda n: (0, 0)),
            pl.BlockSpec((1, 1), lambda n: (0, 0)),
            pl.BlockSpec((2, C, C), lambda n: (0, 0, 0)),
            pl.BlockSpec((C, 4), lambda n: (0, 0)),
            pl.BlockSpec((4, HW), lambda n: (0, 0)),
        ],
        out_specs=pl.BlockSpec((NB, C + 2, HW), lambda n: (n, 0, 0)),
        compiler_params=pltpu.CompilerParams(
            dimension_semantics=("parallel",),
            vmem_limit_bytes=32 * 1024 * 1024,
        ),
    )(x_flat, w_top, b_mask_a, w_cc, vecs, border)

    return out_flat.reshape(N, C + 2, H, W)


# ----------------------------- pure-JAX reference ---------------------------
def reference_forward(x, params):
    w_mask, b_mask, w1, b1, gamma, beta, w2, b2 = params
    N, C, H, W = x.shape

    # ContextBlock2d
    logits = jnp.einsum('nchw,c->nhw', x, w_mask) + b_mask           # (N,H,W)
    attn = jax.nn.softmax(logits.reshape(N, H * W), axis=-1).reshape(N, H, W)
    ctx = jnp.einsum('nchw,nhw->nc', x, attn)                        # (N,C)
    hidden = ctx @ w1.T + b1[None, :]
    mu = hidden.mean(axis=-1, keepdims=True)
    var = ((hidden - mu) ** 2).mean(axis=-1, keepdims=True)
    hidden = (hidden - mu) / jnp.sqrt(var + 1e-5) * gamma[None, :] + beta[None, :]
    hidden = jnp.maximum(hidden, 0.0)
    add_term = hidden @ w2.T + b2[None, :]
    out_gc = x + add_term[:, :, None, None]

    # Sobel branch
    sob_x = jnp.array([[-1., 0., 1.], [-2., 0., 2.], [-1., 0., 1.]], jnp.float32)
    sob_y = jnp.array([[-1., -2., -1.], [0., 0., 0.], [1., 2., 1.]], jnp.float32)
    w_sob = jnp.stack([jnp.tile(sob_x[None], (C, 1, 1)),
                       jnp.tile(sob_y[None], (C, 1, 1))], axis=0)    # (2,C,3,3)
    edge = lax.conv_general_dilated(
        x, w_sob, window_strides=(1, 1), padding=((1, 1), (1, 1)),
        dimension_numbers=('NCHW', 'OIHW', 'NCHW'))

    return jnp.concatenate([out_gc, edge], axis=1)


# ----------------------------- main ------------------------------------------
if __name__ == "__main__":
    N, C, H, W = 2, 4, 16, 16
    key = jax.random.PRNGKey(0)
    ks = jax.random.split(key, 7)

    x = jax.random.normal(ks[0], (N, C, H, W), jnp.float32)

    # deterministic synthetic parameters (no checkpoint load)
    w_mask = 0.5 * jax.random.normal(ks[1], (C,), jnp.float32)   # conv_mask weight
    b_mask = 0.1 * jax.random.normal(ks[2], (), jnp.float32)     # conv_mask bias
    w1 = 0.5 * jax.random.normal(ks[3], (C, C), jnp.float32)     # channel_add conv1
    b1 = 0.1 * jax.random.normal(ks[4], (C,), jnp.float32)
    gamma = jnp.ones((C,), jnp.float32)                          # LayerNorm weight
    beta = jnp.zeros((C,), jnp.float32)                          # LayerNorm bias
    w2 = 0.5 * jax.random.normal(ks[5], (C, C), jnp.float32)     # channel_add conv2
    b2 = 0.1 * jax.random.normal(ks[6], (C,), jnp.float32)
    params = (w_mask, b_mask, w1, b1, gamma, beta, w2, b2)

    out = context_edge_enhance(x, params)
    out = jax.block_until_ready(out)

    ref = reference_forward(x, params)
    assert out.shape == (N, C + 2, H, W), out.shape
    assert jnp.allclose(out, ref, rtol=1e-4, atol=1e-4), \
        float(jnp.max(jnp.abs(out - ref)))

    print("KERNEL_OK")
</pallas_src>

<mosaic_0001>
module attributes {stable_mosaic.version = 11 : i64} {
  func.func @_cefem_kernel(%arg0: i32, %arg1: memref<2x4x256xf32, #tpu.memory_space<vmem>>, %arg2: memref<2x4xf32, #tpu.memory_space<vmem>>, %arg3: memref<1x1xf32, #tpu.memory_space<vmem>>, %arg4: memref<2x4x4xf32, #tpu.memory_space<vmem>>, %arg5: memref<4x4xf32, #tpu.memory_space<vmem>>, %arg6: memref<4x256xf32, #tpu.memory_space<vmem>>, %arg7: memref<2x6x256xf32, #tpu.memory_space<vmem>>) attributes {dimension_semantics = [#tpu.dimension_semantics<parallel>], iteration_bounds = array<i64: 1>, scalar_prefetch = 0 : i64, scratch_operands = 0 : i64, tpu.core_type = #tpu.core_type<tc>, window_params = [{transform_indices = @transform_0, window_bounds = array<i64: 2, 4, 256>}, {pipeline_mode = #tpu.pipeline_mode<synchronous>, transform_indices = @transform_1, window_bounds = array<i64: 2, 4>}, {pipeline_mode = #tpu.pipeline_mode<synchronous>, transform_indices = @transform_2, window_bounds = array<i64: 1, 1>}, {pipeline_mode = #tpu.pipeline_mode<synchronous>, transform_indices = @transform_3, window_bounds = array<i64: 2, 4, 4>}, {pipeline_mode = #tpu.pipeline_mode<synchronous>, transform_indices = @transform_4, window_bounds = array<i64: 4, 4>}, {pipeline_mode = #tpu.pipeline_mode<synchronous>, transform_indices = @transform_5, window_bounds = array<i64: 4, 256>}, {transform_indices = @transform_6, window_bounds = array<i64: 2, 6, 256>}]} {
    %c0 = arith.constant 0 : index
    %c0_0 = arith.constant 0 : index
    %0 = vector.load %arg2[%c0, %c0_0] : memref<2x4xf32, #tpu.memory_space<vmem>>, vector<2x4xf32>
    %c0_1 = arith.constant 0 : index
    %c0_2 = arith.constant 0 : index
    %1 = vector.load %arg3[%c0_1, %c0_2] : memref<1x1xf32, #tpu.memory_space<vmem>>, vector<1x1xf32>
    %2 = vector.extract %1[0, 0] : f32 from vector<1x1xf32>
    %c0_3 = arith.constant 0 : index
    %c0_4 = arith.constant 0 : index
    %c0_5 = arith.constant 0 : index
    %3 = vector.load %arg4[%c0_3, %c0_4, %c0_5] : memref<2x4x4xf32, #tpu.memory_space<vmem>>, vector<1x4x4xf32>
    %4 = vector.shape_cast %3 : vector<1x4x4xf32> to vector<4x4xf32>
    %c1 = arith.constant 1 : index
    %c0_6 = arith.constant 0 : index
    %c0_7 = arith.constant 0 : index
    %5 = vector.load %arg4[%c1, %c0_6, %c0_7] : memref<2x4x4xf32, #tpu.memory_space<vmem>>, vector<1x4x4xf32>
    %6 = vector.shape_cast %5 : vector<1x4x4xf32> to vector<4x4xf32>
    %c0_8 = arith.constant 0 : index
    %c0_9 = arith.constant 0 : index
    %7 = vector.load %arg5[%c0_8, %c0_9] : memref<4x4xf32, #tpu.memory_space<vmem>>, vector<4x4xf32>
    %8 = vector.extract_strided_slice %7 {offsets = [0, 0], sizes = [4, 1], strides = [1, 1]} : vector<4x4xf32> to vector<4x1xf32>
    %9 = vector.extract_strided_slice %7 {offsets = [0, 1], sizes = [4, 1], strides = [1, 1]} : vector<4x4xf32> to vector<4x1xf32>
    %10 = vector.extract_strided_slice %7 {offsets = [0, 2], sizes = [4, 1], strides = [1, 1]} : vector<4x4xf32> to vector<4x1xf32>
    %11 = vector.extract_strided_slice %7 {offsets = [0, 3], sizes = [4, 1], strides = [1, 1]} : vector<4x4xf32> to vector<4x1xf32>
    %c0_10 = arith.constant 0 : index
    %c0_11 = arith.constant 0 : index
    %12 = vector.load %arg6[%c0_10, %c0_11] : memref<4x256xf32, #tpu.memory_space<vmem>>, vector<4x256xf32>
    %13 = vector.extract_strided_slice %12 {offsets = [0, 0], sizes = [1, 256], strides = [1, 1]} : vector<4x256xf32> to vector<1x256xf32>
    %14 = vector.extract_strided_slice %12 {offsets = [1, 0], sizes = [1, 256], strides = [1, 1]} : vector<4x256xf32> to vector<1x256xf32>
    %15 = vector.extract_strided_slice %12 {offsets = [2, 0], sizes = [1, 256], strides = [1, 1]} : vector<4x256xf32> to vector<1x256xf32>
    %16 = vector.extract_strided_slice %12 {offsets = [3, 0], sizes = [1, 256], strides = [1, 1]} : vector<4x256xf32> to vector<1x256xf32>
    %c0_12 = arith.constant 0 : index
    %c0_13 = arith.constant 0 : index
    %c0_14 = arith.constant 0 : index
    %17 = vector.load %arg1[%c0_12, %c0_13, %c0_14] : memref<2x4x256xf32, #tpu.memory_space<vmem>>, vector<1x4x256xf32>
    %18 = vector.shape_cast %17 : vector<1x4x256xf32> to vector<4x256xf32>
    %cst = arith.constant dense<0.000000e+00> : vector<2x256xf32>
    %19 = tpu.matmul %0, %18, %cst {dimension_numbers = #tpu.dot_dimension_numbers<[1], [0], [0], [1], [0, 0, 1, 1], [], []>} : vector<2x4xf32>, vector<4x256xf32>, vector<2x256xf32> -> vector<2x256xf32>
    %20 = vector.extract_strided_slice %19 {offsets = [0, 0], sizes = [1, 256], strides = [1, 1]} : vector<2x256xf32> to vector<1x256xf32>
    %21 = vector.broadcast %2 : f32 to vector<1x256xf32>
    %22 = arith.addf %20, %21 : vector<1x256xf32>
    %23 = vector.extract_strided_slice %19 {offsets = [1, 0], sizes = [1, 256], strides = [1, 1]} : vector<2x256xf32> to vector<1x256xf32>
    %cst_15 = arith.constant dense<0xFF800000> : vector<1xf32>
    %24 = vector.multi_reduction <maximumf>, %22, %cst_15 [1] : vector<1x256xf32> to vector<1xf32>
    %25 = vector.shape_cast %24 : vector<1xf32> to vector<1x1xf32>
    %26 = vector.broadcast %25 : vector<1x1xf32> to vector<1x256xf32>
    %27 = arith.subf %22, %26 : vector<1x256xf32>
    %28 = math.exp %27 : vector<1x256xf32>
    %cst_16 = arith.constant dense<0.000000e+00> : vector<1xf32>
    %29 = vector.multi_reduction <add>, %28, %cst_16 [1] : vector<1x256xf32> to vector<1xf32>
    %30 = vector.shape_cast %29 : vector<1xf32> to vector<1x1xf32>
    %31 = tpu.reciprocal %30 : vector<1x1xf32> -> vector<1x1xf32>
    %32 = vector.broadcast %31 : vector<1x1xf32> to vector<1x256xf32>
    %33 = arith.mulf %28, %32 : vector<1x256xf32>
    %cst_17 = arith.constant dense<0.000000e+00> : vector<4x1xf32>
    %34 = tpu.matmul %18, %33, %cst_17 {dimension_numbers = #tpu.dot_dimension_numbers<[1], [1], [0], [0], [0, 0, 1, 0], [], []>} : vector<4x256xf32>, vector<1x256xf32>, vector<4x1xf32> -> vector<4x1xf32>
    %cst_18 = arith.constant dense<0.000000e+00> : vector<4x1xf32>
    %35 = tpu.matmul %4, %34, %cst_18 {dimension_numbers = #tpu.dot_dimension_numbers<[1], [0], [0], [1], [0, 0, 1, 1], [], []>} : vector<4x4xf32>, vector<4x1xf32>, vector<4x1xf32> -> vector<4x1xf32>
    %36 = arith.addf %35, %8 : vector<4x1xf32>
    %cst_19 = arith.constant dense<0.000000e+00> : vector<1xf32>
    %37 = vector.multi_reduction <add>, %36, %cst_19 [0] : vector<4x1xf32> to vector<1xf32>
    %38 = vector.shape_cast %37 : vector<1xf32> to vector<1x1xf32>
    %cst_20 = arith.constant 4.000000e+00 : f32
    %39 = vector.broadcast %cst_20 : f32 to vector<1x1xf32>
    %40 = arith.divf %38, %39 : vector<1x1xf32>
    %41 = vector.broadcast %40 : vector<1x1xf32> to vector<4x1xf32>
    %42 = arith.subf %36, %41 : vector<4x1xf32>
    %43 = arith.mulf %42, %42 : vector<4x1xf32>
    %cst_21 = arith.constant dense<0.000000e+00> : vector<1xf32>
    %44 = vector.multi_reduction <add>, %43, %cst_21 [0] : vector<4x1xf32> to vector<1xf32>
    %45 = vector.shape_cast %44 : vector<1xf32> to vector<1x1xf32>
    %cst_22 = arith.constant 4.000000e+00 : f32
    %46 = vector.broadcast %cst_22 : f32 to vector<1x1xf32>
    %47 = arith.divf %45, %46 : vector<1x1xf32>
    %48 = vector.broadcast %40 : vector<1x1xf32> to vector<4x1xf32>
    %49 = arith.subf %36, %48 : vector<4x1xf32>
    %cst_23 = arith.constant 9.99999974E-6 : f32
    %50 = vector.broadcast %cst_23 : f32 to vector<1x1xf32>
    %51 = arith.addf %47, %50 : vector<1x1xf32>
    %52 = math.rsqrt %51 : vector<1x1xf32>
    %53 = vector.broadcast %52 : vector<1x1xf32> to vector<4x1xf32>
    %54 = arith.mulf %49, %53 : vector<4x1xf32>
    %55 = arith.mulf %54, %9 : vector<4x1xf32>
    %56 = arith.addf %55, %10 : vector<4x1xf32>
    %cst_24 = arith.constant 0.000000e+00 : f32
    %57 = vector.broadcast %cst_24 : f32 to vector<4x1xf32>
    %58 = arith.maximumf %56, %57 : vector<4x1xf32>
    %cst_25 = arith.constant dense<0.000000e+00> : vector<4x1xf32>
    %59 = tpu.matmul %6, %58, %cst_25 {dimension_numbers = #tpu.dot_dimension_numbers<[1], [0], [0], [1], [0, 0, 1, 1], [], []>} : vector<4x4xf32>, vector<4x1xf32>, vector<4x1xf32> -> vector<4x1xf32>
    %60 = arith.addf %59, %11 : vector<4x1xf32>
    %61 = vector.broadcast %60 : vector<4x1xf32> to vector<4x256xf32>
    %62 = arith.addf %18, %61 : vector<4x256xf32>
    %c1_i32 = arith.constant 1 : i32
    %63 = tpu.dynamic_rotate %23 by %c1_i32 dim 1 : vector<1x256xf32>, i32 -> vector<1x256xf32>
    %64 = arith.mulf %13, %63 : vector<1x256xf32>
    %c255_i32 = arith.constant 255 : i32
    %65 = tpu.dynamic_rotate %23 by %c255_i32 dim 1 : vector<1x256xf32>, i32 -> vector<1x256xf32>
    %66 = arith.mulf %14, %65 : vector<1x256xf32>
    %67 = arith.subf %66, %64 : vector<1x256xf32>
    %cst_26 = arith.constant 2.000000e+00 : f32
    %68 = vector.broadcast %cst_26 : f32 to vector<1x256xf32>
    %69 = arith.mulf %68, %23 : vector<1x256xf32>
    %70 = arith.addf %64, %69 : vector<1x256xf32>
    %71 = arith.addf %70, %66 : vector<1x256xf32>
    %c16_i32 = arith.constant 16 : i32
    %72 = tpu.dynamic_rotate %67 by %c16_i32 dim 1 : vector<1x256xf32>, i32 -> vector<1x256xf32>
    %73 = arith.mulf %15, %72 : vector<1x256xf32>
    %cst_27 = arith.constant 2.000000e+00 : f32
    %74 = vector.broadcast %cst_27 : f32 to vector<1x256xf32>
    %75 = arith.mulf %74, %67 : vector<1x256xf32>
    %76 = arith.addf %73, %75 : vector<1x256xf32>
    %c240_i32 = arith.constant 240 : i32
    %77 = tpu.dynamic_rotate %67 by %c240_i32 dim 1 : vector<1x256xf32>, i32 -> vector<1x256xf32>
    %78 = arith.mulf %16, %77 : vector<1x256xf32>
    %79 = arith.addf %76, %78 : vector<1x256xf32>
    %c240_i32_28 = arith.constant 240 : i32
    %80 = tpu.dynamic_rotate %71 by %c240_i32_28 dim 1 : vector<1x256xf32>, i32 -> vector<1x256xf32>
    %81 = arith.mulf %16, %80 : vector<1x256xf32>
    %c16_i32_29 = arith.constant 16 : i32
    %82 = tpu.dynamic_rotate %71 by %c16_i32_29 dim 1 : vector<1x256xf32>, i32 -> vector<1x256xf32>
    %83 = arith.mulf %15, %82 : vector<1x256xf32>
    %84 = arith.subf %81, %83 : vector<1x256xf32>
    %c0_30 = arith.constant 0 : index
    %c0_31 = arith.constant 0 : index
    %c0_32 = arith.constant 0 : index
    %85 = vector.load %arg7[%c0_30, %c0_31, %c0_32] : memref<2x6x256xf32, #tpu.memory_space<vmem>>, vector<1x4x256xf32>
    %86 = vector.shape_cast %85 : vector<1x4x256xf32> to vector<4x256xf32>
    %87 = vector.shape_cast %62 : vector<4x256xf32> to vector<1x4x256xf32>
    tpu.vector_store %arg7[%c0_30, %c0_31, %c0_32], %87 {strides = array<i32>} : memref<2x6x256xf32, #tpu.memory_space<vmem>>, vector<1x4x256xf32>,
    %88 = tpu.concatenate %79, %84 in 0 : vector<1x256xf32>, vector<1x256xf32> -> vector<2x256xf32>
    %c0_33 = arith.constant 0 : index
    %c4 = arith.constant 4 : index
    %c0_34 = arith.constant 0 : index
    %89 = vector.load %arg7[%c0_33, %c4, %c0_34] : memref<2x6x256xf32, #tpu.memory_space<vmem>>, vector<1x2x256xf32>
    %90 = vector.shape_cast %89 : vector<1x2x256xf32> to vector<2x256xf32>
    %91 = vector.shape_cast %88 : vector<2x256xf32> to vector<1x2x256xf32>
    tpu.vector_store %arg7[%c0_33, %c4, %c0_34], %91 {strides = array<i32>} : memref<2x6x256xf32, #tpu.memory_space<vmem>>, vector<1x2x256xf32>,
    %c1_35 = arith.constant 1 : index
    %c0_36 = arith.constant 0 : index
    %c0_37 = arith.constant 0 : index
    %92 = vector.load %arg1[%c1_35, %c0_36, %c0_37] : memref<2x4x256xf32, #tpu.memory_space<vmem>>, vector<1x4x256xf32>
    %93 = vector.shape_cast %92 : vector<1x4x256xf32> to vector<4x256xf32>
    %cst_38 = arith.constant dense<0.000000e+00> : vector<2x256xf32>
    %94 = tpu.matmul %0, %93, %cst_38 {dimension_numbers = #tpu.dot_dimension_numbers<[1], [0], [0], [1], [0, 0, 1, 1], [], []>} : vector<2x4xf32>, vector<4x256xf32>, vector<2x256xf32> -> vector<2x256xf32>
    %95 = vector.extract_strided_slice %94 {offsets = [0, 0], sizes = [1, 256], strides = [1, 1]} : vector<2x256xf32> to vector<1x256xf32>
    %96 = vector.broadcast %2 : f32 to vector<1x256xf32>
    %97 = arith.addf %95, %96 : vector<1x256xf32>
    %98 = vector.extract_strided_slice %94 {offsets = [1, 0], sizes = [1, 256], strides = [1, 1]} : vector<2x256xf32> to vector<1x256xf32>
    %cst_39 = arith.constant dense<0xFF800000> : vector<1xf32>
    %99 = vector.multi_reduction <maximumf>, %97, %cst_39 [1] : vector<1x256xf32> to vector<1xf32>
    %100 = vector.shape_cast %99 : vector<1xf32> to vector<1x1xf32>
    %101 = vector.broadcast %100 : vector<1x1xf32> to vector<1x256xf32>
    %102 = arith.subf %97, %101 : vector<1x256xf32>
    %103 = math.exp %102 : vector<1x256xf32>
    %cst_40 = arith.constant dense<0.000000e+00> : vector<1xf32>
    %104 = vector.multi_reduction <add>, %103, %cst_40 [1] : vector<1x256xf32> to vector<1xf32>
    %105 = vector.shape_cast %104 : vector<1xf32> to vector<1x1xf32>
    %106 = tpu.reciprocal %105 : vector<1x1xf32> -> vector<1x1xf32>
    %107 = vector.broadcast %106 : vector<1x1xf32> to vector<1x256xf32>
    %108 = arith.mulf %103, %107 : vector<1x256xf32>
    %cst_41 = arith.constant dense<0.000000e+00> : vector<4x1xf32>
    %109 = tpu.matmul %93, %108, %cst_41 {dimension_numbers = #tpu.dot_dimension_numbers<[1], [1], [0], [0], [0, 0, 1, 0], [], []>} : vector<4x256xf32>, vector<1x256xf32>, vector<4x1xf32> -> vector<4x1xf32>
    %cst_42 = arith.constant dense<0.000000e+00> : vector<4x1xf32>
    %110 = tpu.matmul %4, %109, %cst_42 {dimension_numbers = #tpu.dot_dimension_numbers<[1], [0], [0], [1], [0, 0, 1, 1], [], []>} : vector<4x4xf32>, vector<4x1xf32>, vector<4x1xf32> -> vector<4x1xf32>
    %111 = arith.addf %110, %8 : vector<4x1xf32>
    %cst_43 = arith.constant dense<0.000000e+00> : vector<1xf32>
    %112 = vector.multi_reduction <add>, %111, %cst_43 [0] : vector<4x1xf32> to vector<1xf32>
    %113 = vector.shape_cast %112 : vector<1xf32> to vector<1x1xf32>
    %cst_44 = arith.constant 4.000000e+00 : f32
    %114 = vector.broadcast %cst_44 : f32 to vector<1x1xf32>
    %115 = arith.divf %113, %114 : vector<1x1xf32>
    %116 = vector.broadcast %115 : vector<1x1xf32> to vector<4x1xf32>
    %117 = arith.subf %111, %116 : vector<4x1xf32>
    %118 = arith.mulf %117, %117 : vector<4x1xf32>
    %cst_45 = arith.constant dense<0.000000e+00> : vector<1xf32>
    %119 = vector.multi_reduction <add>, %118, %cst_45 [0] : vector<4x1xf32> to vector<1xf32>
    %120 = vector.shape_cast %119 : vector<1xf32> to vector<1x1xf32>
    %cst_46 = arith.constant 4.000000e+00 : f32
    %121 = vector.broadcast %cst_46 : f32 to vector<1x1xf32>
    %122 = arith.divf %120, %121 : vector<1x1xf32>
    %123 = vector.broadcast %115 : vector<1x1xf32> to vector<4x1xf32>
    %124 = arith.subf %111, %123 : vector<4x1xf32>
    %cst_47 = arith.constant 9.99999974E-6 : f32
    %125 = vector.broadcast %cst_47 : f32 to vector<1x1xf32>
    %126 = arith.addf %122, %125 : vector<1x1xf32>
    %127 = math.rsqrt %126 : vector<1x1xf32>
    %128 = vector.broadcast %127 : vector<1x1xf32> to vector<4x1xf32>
    %129 = arith.mulf %124, %128 : vector<4x1xf32>
    %130 = arith.mulf %129, %9 : vector<4x1xf32>
    %131 = arith.addf %130, %10 : vector<4x1xf32>
    %cst_48 = arith.constant 0.000000e+00 : f32
    %132 = vector.broadcast %cst_48 : f32 to vector<4x1xf32>
    %133 = arith.maximumf %131, %132 : vector<4x1xf32>
    %cst_49 = arith.constant dense<0.000000e+00> : vector<4x1xf32>
    %134 = tpu.matmul %6, %133, %cst_49 {dimension_numbers = #tpu.dot_dimension_numbers<[1], [0], [0], [1], [0, 0, 1, 1], [], []>} : vector<4x4xf32>, vector<4x1xf32>, vector<4x1xf32> -> vector<4x1xf32>
    %135 = arith.addf %134, %11 : vector<4x1xf32>
    %136 = vector.broadcast %135 : vector<4x1xf32> to vector<4x256xf32>
    %137 = arith.addf %93, %136 : vector<4x256xf32>
    %c1_i32_50 = arith.constant 1 : i32
    %138 = tpu.dynamic_rotate %98 by %c1_i32_50 dim 1 : vector<1x256xf32>, i32 -> vector<1x256xf32>
    %139 = arith.mulf %13, %138 : vector<1x256xf32>
    %c255_i32_51 = arith.constant 255 : i32
    %140 = tpu.dynamic_rotate %98 by %c255_i32_51 dim 1 : vector<1x256xf32>, i32 -> vector<1x256xf32>
    %141 = arith.mulf %14, %140 : vector<1x256xf32>
    %142 = arith.subf %141, %139 : vector<1x256xf32>
    %cst_52 = arith.constant 2.000000e+00 : f32
    %143 = vector.broadcast %cst_52 : f32 to vector<1x256xf32>
    %144 = arith.mulf %143, %98 : vector<1x256xf32>
    %145 = arith.addf %139, %144 : vector<1x256xf32>
    %146 = arith.addf %145, %141 : vector<1x256xf32>
    %c16_i32_53 = arith.constant 16 : i32
    %147 = tpu.dynamic_rotate %142 by %c16_i32_53 dim 1 : vector<1x256xf32>, i32 -> vector<1x256xf32>
    %148 = arith.mulf %15, %147 : vector<1x256xf32>
    %cst_54 = arith.constant 2.000000e+00 : f32
    %149 = vector.broadcast %cst_54 : f32 to vector<1x256xf32>
    %150 = arith.mulf %149, %142 : vector<1x256xf32>
    %151 = arith.addf %148, %150 : vector<1x256xf32>
    %c240_i32_55 = arith.constant 240 : i32
    %152 = tpu.dynamic_rotate %142 by %c240_i32_55 dim 1 : vector<1x256xf32>, i32 -> vector<1x256xf32>
    %153 = arith.mulf %16, %152 : vector<1x256xf32>
    %154 = arith.addf %151, %153 : vector<1x256xf32>
    %c240_i32_56 = arith.constant 240 : i32
    %155 = tpu.dynamic_rotate %146 by %c240_i32_56 dim 1 : vector<1x256xf32>, i32 -> vector<1x256xf32>
    %156 = arith.mulf %16, %155 : vector<1x256xf32>
    %c16_i32_57 = arith.constant 16 : i32
    %157 = tpu.dynamic_rotate %146 by %c16_i32_57 dim 1 : vector<1x256xf32>, i32 -> vector<1x256xf32>
    %158 = arith.mulf %15, %157 : vector<1x256xf32>
    %159 = arith.subf %156, %158 : vector<1x256xf32>
    %c1_58 = arith.constant 1 : index
    %c0_59 = arith.constant 0 : index
    %c0_60 = arith.constant 0 : index
    %160 = vector.load %arg7[%c1_58, %c0_59, %c0_60] : memref<2x6x256xf32, #tpu.memory_space<vmem>>, vector<1x4x256xf32>
    %161 = vector.shape_cast %160 : vector<1x4x256xf32> to vector<4x256xf32>
    %162 = vector.shape_cast %137 : vector<4x256xf32> to vector<1x4x256xf32>
    tpu.vector_store %arg7[%c1_58, %c0_59, %c0_60], %162 {strides = array<i32>} : memref<2x6x256xf32, #tpu.memory_space<vmem>>, vector<1x4x256xf32>,
    %163 = tpu.concatenate %154, %159 in 0 : vector<1x256xf32>, vector<1x256xf32> -> vector<2x256xf32>
    %c1_61 = arith.constant 1 : index
    %c4_62 = arith.constant 4 : index
    %c0_63 = arith.constant 0 : index
    %164 = vector.load %arg7[%c1_61, %c4_62, %c0_63] : memref<2x6x256xf32, #tpu.memory_space<vmem>>, vector<1x2x256xf32>
    %165 = vector.shape_cast %164 : vector<1x2x256xf32> to vector<2x256xf32>
    %166 = vector.shape_cast %163 : vector<2x256xf32> to vector<1x2x256xf32>
    tpu.vector_store %arg7[%c1_61, %c4_62, %c0_63], %166 {strides = array<i32>} : memref<2x6x256xf32, #tpu.memory_space<vmem>>, vector<1x2x256xf32>,
    return
  }
  func.func @transform_0(%arg0: i32) -> (i32, i32, i32) {
    %c0_i32 = arith.constant 0 : i32
    %c0_i32_0 = arith.constant 0 : i32
    %c0_i32_1 = arith.constant 0 : i32
    return %arg0, %c0_i32, %c0_i32_0 : i32, i32, i32
  }
  func.func @transform_1(%arg0: i32) -> (i32, i32) {
    %c0_i32 = arith.constant 0 : i32
    %c0_i32_0 = arith.constant 0 : i32
    %c0_i32_1 = arith.constant 0 : i32
    return %c0_i32, %c0_i32_0 : i32, i32
  }
  func.func @transform_2(%arg0: i32) -> (i32, i32) {
    %c0_i32 = arith.constant 0 : i32
    %c0_i32_0 = arith.constant 0 : i32
    %c0_i32_1 = arith.constant 0 : i32
    return %c0_i32, %c0_i32_0 : i32, i32
  }
  func.func @transform_3(%arg0: i32) -> (i32, i32, i32) {
    %c0_i32 = arith.constant 0 : i32
    %c0_i32_0 = arith.constant 0 : i32
    %c0_i32_1 = arith.constant 0 : i32
    %c0_i32_2 = arith.constant 0 : i32
    return %c0_i32, %c0_i32_0, %c0_i32_1 : i32, i32, i32
  }
  func.func @transform_4(%arg0: i32) -> (i32, i32) {
    %c0_i32 = arith.constant 0 : i32
    %c0_i32_0 = arith.constant 0 : i32
    %c0_i32_1 = arith.constant 0 : i32
    return %c0_i32, %c0_i32_0 : i32, i32
  }
  func.func @transform_5(%arg0: i32) -> (i32, i32) {
    %c0_i32 = arith.constant 0 : i32
    %c0_i32_0 = arith.constant 0 : i32
    %c0_i32_1 = arith.constant 0 : i32
    return %c0_i32, %c0_i32_0 : i32, i32
  }
  func.func @transform_6(%arg0: i32) -> (i32, i32, i32) {
    %c0_i32 = arith.constant 0 : i32
    %c0_i32_0 = arith.constant 0 : i32
    %c0_i32_1 = arith.constant 0 : i32
    return %arg0, %c0_i32, %c0_i32_0 : i32, i32, i32
  }
}

</mosaic_0001>

<llo_original>
// kernel: tpu_custom_call.1
$region0: #{tpu_custom_call.1}
  #allocation0 [shape = 'u32[]', space=smem, size = 0x4, offset = 0x4, fixed_abs, tag = 'smem constant byte address 0x4 - core index']
  #allocation1 [shape = 'u32[72,128]{1,0:T(1,128)}', space=vmem, size = 0x9000, scoped, tag = 'internal scratch']
  #allocation2 [shape = 'f32[1,1]{1,0:T(1,128)S(1)}', space=vmem, size = 0x200, scoped, tag = 'scoped memory for tpu_custom_call.1']
  %s0 = inlined_call_operand.hbm [shape: f32[2,4,256], index: 0, kind: input, shape index: {}]
  %s1 = inlined_call_operand.hbm [shape: f32[2,4], index: 1, kind: input, shape index: {}]
  %s2 = inlined_call_operand.<no memory space> [shape: f32[1,1], index: 2, kind: input, shape index: {}]
  %s3 = inlined_call_operand.hbm [shape: f32[2,4,4], index: 3, kind: input, shape index: {}]
  %s4 = inlined_call_operand.vmem [shape: f32[4,4], index: 4, kind: input, shape index: {}]
  %s5 = inlined_call_operand.hbm [shape: f32[4,256], index: 5, kind: input, shape index: {}]
  %s6 = inlined_call_operand.vmem [shape: f32[2,6,256], index: 6, kind: output, shape index: {}]
  %s7 = sld [smem:[#allocation0]]
  $region50: #{tpu_custom_call.1} parent=0
    _
  %s9 = ssub.s32 1, %s7
  %s10 = scalar_select 0, %s9, %s7
  %v11 = vstv %s2
  %12 = vst [vmem:[#allocation2] sm:$0x1] %v11
  $region1: #{tpu_custom_call.1} parent=0
    #allocation3 [shape = 'u8[8192]{0}', space=vmem, size = 0x2000, scoped, tag = 'input window, operand 0, single buffered']
    #allocation4 [shape = 's32[1]{0}', space=sflag, size = 0x4, scoped, tag = 'scoped memory for tpu_custom_call.1']
    #allocation5 [shape = 'u8[1024]{0}', space=vmem, size = 0x400, scoped, tag = 'input window, operand 1, single buffered']
    #allocation6 [shape = 's32[1]{0}', space=sflag, size = 0x4, scoped, tag = 'scoped memory for tpu_custom_call.1']
    #allocation7 [shape = 'u8[4096]{0}', space=vmem, size = 0x1000, scoped, tag = 'input window, operand 3, single buffered']
    #allocation8 [shape = 'u8[4096]{0}', space=vmem, size = 0x1000, scoped, tag = 'input window, operand 5, single buffered']
    #allocation9 [shape = 's32[1]{0}', space=sflag, size = 0x4, scoped, tag = 'scoped memory for tpu_custom_call.1']
    %13 = vsyncpa [#allocation4], 0
    %14 = vsyncpa [#allocation6], 0
    %15 = vsyncpa [#allocation9], 0
    // Predicated region
    $region2: #{tpu_custom_call.1} parent=1 // pred_check
      _
    $region3: #{tpu_custom_call.1} parent=1 // pred_check_branch
      %17 = sbr.rel (0) target = $region5
    $region4: #{tpu_custom_call.1} parent=1 // pred_region
      %19 = vsyncadd [#allocation4], 0
      %s20 = sshll.u32 %s0, 4
      %s21 = int_to_ptr.hbm [resolvable:$true] %s20
      %s22 = sshll.u32 [#allocation3], 4
      %s23 = int_to_ptr.vmem [resolvable:$true] %s22
      %28 = dma.hbm_to_vmem [thread:$0]  %s21, 256, %s23, [#allocation4], 128, 128, 8
    $region5: #{tpu_custom_call.1} parent=1 // pred_fallthru
      _
    // Predicated region
    $region6: #{tpu_custom_call.1} parent=1 // pred_check
      _
    $region7: #{tpu_custom_call.1} parent=1 // pred_check_branch
      %30 = sbr.rel (0) target = $region9
    $region8: #{tpu_custom_call.1} parent=1 // pred_region
      %32 = vsyncadd [#allocation6], 0
      %s34 = sshll.u32 %s1, 4
      %s35 = int_to_ptr.hbm [resolvable:$true] %s34
      %s36 = sshll.u32 [#allocation5], 4
      %s37 = int_to_ptr.vmem [resolvable:$true] %s36
      %39 = dma.hbm_to_vmem [thread:$0]  %s35, 32, %s37, [#allocation6]
    $region9: #{tpu_custom_call.1} parent=1 // pred_fallthru
      _
    // Predicated region
    $region10: #{tpu_custom_call.1} parent=1 // pred_check
      _
    $region11: #{tpu_custom_call.1} parent=1 // pred_check_branch
      %41 = sbr.rel (0) target = $region13
    $region12: #{tpu_custom_call.1} parent=1 // pred_region
      _
    $region13: #{tpu_custom_call.1} parent=1 // pred_fallthru
      _
    // Predicated region
    $region14: #{tpu_custom_call.1} parent=1 // pred_check
      _
    $region15: #{tpu_custom_call.1} parent=1 // pred_check_branch
      %43 = sbr.rel (0) target = $region17
    $region16: #{tpu_custom_call.1} parent=1 // pred_region
      %45 = vsyncadd [#allocation6], 0
      %s46 = sshll.u32 %s3, 4
      %s47 = int_to_ptr.hbm [resolvable:$true] %s46
      %s48 = sshll.u32 [#allocation7], 4
      %s49 = int_to_ptr.vmem [resolvable:$true] %s48
      %54 = dma.hbm_to_vmem [thread:$0]  %s47, 128, %s49, [#allocation6], 64, 64, 4
    $region17: #{tpu_custom_call.1} parent=1 // pred_fallthru
      _
    // Predicated region
    $region18: #{tpu_custom_call.1} parent=1 // pred_check
      _
    $region19: #{tpu_custom_call.1} parent=1 // pred_check_branch
      %56 = sbr.rel (0) target = $region21
    $region20: #{tpu_custom_call.1} parent=1 // pred_region
      _
    $region21: #{tpu_custom_call.1} parent=1 // pred_fallthru
      _
    // Predicated region
    $region22: #{tpu_custom_call.1} parent=1 // pred_check
      _
    $region23: #{tpu_custom_call.1} parent=1 // pred_check_branch
      %58 = sbr.rel (0) target = $region25
    $region24: #{tpu_custom_call.1} parent=1 // pred_region
      %60 = vsyncadd [#allocation9], 0
      %s62 = sshll.u32 %s5, 4
      %s63 = int_to_ptr.hbm [resolvable:$true] %s62
      %s64 = sshll.u32 [#allocation8], 4
      %s65 = int_to_ptr.vmem [resolvable:$true] %s64
      %67 = dma.hbm_to_vmem [thread:$0]  %s63, 128, %s65, [#allocation9]
    $region25: #{tpu_custom_call.1} parent=1 // pred_fallthru
      _
    // Predicated region
    $region26: #{tpu_custom_call.1} parent=1 // pred_check
      _
    $region27: #{tpu_custom_call.1} parent=1 // pred_check_branch
      %69 = sbr.rel (0) target = $region29
    $region28: #{tpu_custom_call.1} parent=1 // pred_region
      %71 = dma.done [#allocation4], 256
    $region29: #{tpu_custom_call.1} parent=1 // pred_fallthru
      _
    // Predicated region
    $region30: #{tpu_custom_call.1} parent=1 // pred_check
      _
    $region31: #{tpu_custom_call.1} parent=1 // pred_check_branch
      %73 = sbr.rel (0) target = $region33
    $region32: #{tpu_custom_call.1} parent=1 // pred_region
      %75 = dma.done [#allocation6], 32
    $region33: #{tpu_custom_call.1} parent=1 // pred_fallthru
      _
    // Predicated region
    $region34: #{tpu_custom_call.1} parent=1 // pred_check
      _
    $region35: #{tpu_custom_call.1} parent=1 // pred_check_branch
      %77 = sbr.rel (0) target = $region37
    $region36: #{tpu_custom_call.1} parent=1 // pred_region
      %79 = dma.done [#allocation6], 128
    $region37: #{tpu_custom_call.1} parent=1 // pred_fallthru
      _
    // Predicated region
    $region38: #{tpu_custom_call.1} parent=1 // pred_check
      _
    $region39: #{tpu_custom_call.1} parent=1 // pred_check_branch
      %81 = sbr.rel (0) target = $region41
    $region40: #{tpu_custom_call.1} parent=1 // pred_region
      %83 = dma.done [#allocation9], 128
    $region41: #{tpu_custom_call.1} parent=1 // pred_fallthru
      _
    %v84 = vld [vmem:[#allocation5] sm:$0x3]
    %v85 = vld [vmem:[#allocation2] sm:$0x1]
    %s86 = vtos %v85
    %v87 = vld [vmem:[#allocation7] sm:$0xf]
    %s88 = scalar_lea.vmem [#allocation7], 4
    %v89 = vld [vmem:[%s88] sm:$0xf]
    %v90 = vld [vmem:[%s4] sm:$0xf]
    %v91 = vld [vmem:[#allocation8] sm:$0xff]
    %v92 = vld [vmem:[#allocation3] sm:$0xff]
    %94 = vst [vmem:[#allocation1] ss:$2 sm:$0xff] %v92
    %v95 = vld.sshfl [vmem:[#allocation1] sm:$0xff pattern:$0x75316420]
    %v96 = vld.sshfl [vmem:[#allocation1 + $0x8] sm:$0xff pattern:$0x75316420]
    %vm97 = vcmask 31744
    %v99 = vsel %vm97, %v84, 0
    %vm101 = vcmask 1043456
    %v102 = vsel %vm101, %v95, 0
    %v104 = vsel %vm101, %v96, 0
    %106 = vmatpush.msra.mxu0 0.0
    %107 = vmatpush.msra.mxu0 0.0
    %108 = vmatpush.msra.mxu0 0.0
    %109 = vmatpush.msra.mxu0 0.0
    %110 = vmatpush.msra.mxu0 0.0
    %111 = vmatpush.msra.mxu0 0.0
    %112 = vmatpush.msra.mxu0 0.0
    %113 = vmatpush.msra.mxu0 0.0
    %114 = vmatpush.msra.mxu0 0.0
    %115 = vmatpush.msra.mxu0 0.0
    %116 = vmatpush.msra.mxu0 0.0
    %117 = vmatpush.msra.mxu0 0.0
    %118 = vmatpush.msra.mxu0 0.0
    %119 = vmatpush.msra.mxu0 0.0
    %120 = vmatpush.msra.mxu0 0.0
    %121 = vmatpush.msra.mxu0 %v102
    %122 = vmatmul.f32.gmra.mxu0 %v99
    %v123 = vpop.f32.mrf.mxu0
    %v124 = vadd.f32 0.0, %v123
    %125 = vdwg.mxu0
    %126 = vmatpush.msra.mxu0 0.0
    %127 = vmatpush.msra.mxu0 0.0
    %128 = vmatpush.msra.mxu0 0.0
    %129 = vmatpush.msra.mxu0 0.0
    %130 = vmatpush.msra.mxu0 0.0
    %131 = vmatpush.msra.mxu0 0.0
    %132 = vmatpush.msra.mxu0 0.0
    %133 = vmatpush.msra.mxu0 0.0
    %134 = vmatpush.msra.mxu0 0.0
    %135 = vmatpush.msra.mxu0 0.0
    %136 = vmatpush.msra.mxu0 0.0
    %137 = vmatpush.msra.mxu0 0.0
    %138 = vmatpush.msra.mxu0 0.0
    %139 = vmatpush.msra.mxu0 0.0
    %140 = vmatpush.msra.mxu0 0.0
    %141 = vmatpush.msra.mxu0 %v104
    %142 = vmatmul.f32.gmra.mxu0 %v99
    %v143 = vpop.f32.mrf.mxu0
    %v144 = vadd.f32 0.0, %v143
    %145 = vdwg.mxu0
    %v146 = vstv %s86
    %v147 = vadd.f32 %v124, %v146
    %v148 = vadd.f32 %v144, %v146
    %vm149 = vcmask 1040384
    %v150 = vsel %vm149, %v147, -inf
    %v151 = vsel %vm149, %v148, -inf
    %v152 = vmax.f32 %v150, %v151
    %153 = vmax.xlane.f32.xlu0 %v152
    %v154 = vpop.xlane.xlu0 %153
    %v155 = vsub.f32 %v147, %v154
    %v156 = vsub.f32 %v148, %v154
    %v157 = vmul.f32 %v155, 1.442695
    %v158 = vpow.pop %v157
    %v159 = vmul.f32 %v156, 1.442695
    %v160 = vpow.pop %v159
    %v161 = vsel %vm149, %v158, 0.0
    %v162 = vsel %vm149, %v160, 0.0
    %v163 = vadd.f32 %v161, %v162
    %164 = vadd.xlane.f32.xlu0 %v163
    %v165 = vpop.xlane.xlu0 %164
    %v166 = vrcp.pop %v165
    %v167 = vmul.f32 %v165, %v166
    %v168 = vsub.f32 1.0, %v167
    %v169 = vmul.f32 %v166, %v168
    %v170 = vadd.f32 %v166, %v169
    %vm171 = vweird.f32 %v165
    %vm172 = vweird.f32 %v166
    %vm173 = vmor %vm171, %vm172
    %v174 = vsel %vm173, %v166, %v170
    %v175 = vand.u32 2147483647, %v165
    %vm176 = vcmp.eq.f32.partialorder %v175, 8.507059e+37
    %v177 = vand.u32 %v165, 2147483648
    %v178 = vor.u32 1.1754944e-38, %v177
    %v179 = vsel %vm176, %v178, %v174
    %v180 = vmul.f32 %v158, %v179
    %v181 = vmul.f32 %v160, %v179
    %v182 = vperm.slane %v180, 0
    %v183 = vperm.slane %v181, 0
    %v186 = vrot.slane %v183, 4
    %v187 = vsel %vm101, %v182, %v186
    %v189 = vmul.f32 %v92, %v187
    %191 = vst [vmem:[#allocation1] ss:$2 sm:$0xff] %v189
    %v192 = vld.sshfl [vmem:[#allocation1] sm:$0xff pattern:$0x75316420]
    %v193 = vld.sshfl [vmem:[#allocation1 + $0x8] sm:$0xff pattern:$0x75316420]
    %v196 = vsel %vm101, %v192, 0.0
    %v197 = vsel %vm101, %v193, 0.0
    %v198 = vadd.f32 %v196, %v197
    %199 = vadd.xlane.f32.xlu0 %v198
    %v200 = vpop.xlane.xlu0 %199
    %v202 = vsel %vm97, %v87, 0
    %v205 = vsel %vm101, %v200, 0
    %207 = vmatpush.msra.mxu0 0.0
    %208 = vmatpush.msra.mxu0 0.0
    %209 = vmatpush.msra.mxu0 0.0
    %210 = vmatpush.msra.mxu0 0.0
    %211 = vmatpush.msra.mxu0 0.0
    %212 = vmatpush.msra.mxu0 0.0
    %213 = vmatpush.msra.mxu0 0.0
    %214 = vmatpush.msra.mxu0 0.0
    %215 = vmatpush.msra.mxu0 0.0
    %216 = vmatpush.msra.mxu0 0.0
    %217 = vmatpush.msra.mxu0 0.0
    %218 = vmatpush.msra.mxu0 0.0
    %219 = vmatpush.msra.mxu0 0.0
    %220 = vmatpush.msra.mxu0 0.0
    %221 = vmatpush.msra.mxu0 0.0
    %222 = vmatpush.msra.mxu0 %v205
    %223 = vmatmul.f32.gmra.mxu0 %v202
    %v224 = vpop.f32.mrf.mxu0
    %v225 = vadd.f32 %v90, %v224
    %226 = vdwg.mxu0
    %vm227 = vcmask 3072
    %v228 = vsel %vm227, %v225, 0.0
    %v229 = vrot.slane %v228, 4
    %v230 = vadd.f32 %v228, %v229
    %v231 = vrot.slane %v230, 2
    %v232 = vadd.f32 %v230, %v231
    %v233 = vrot.slane %v232, 1
    %v234 = vadd.f32 %v232, %v233
    %v235 = vrcp.pop 4.0
    %v236 = vmul.f32 4.0, %v235
    %v237 = vsub.f32 1.0, %v236
    %v238 = vmul.f32 %v235, %v237
    %v239 = vadd.f32 %v235, %v238
    %vm240 = vweird.f32 %v235
    %v241 = vsel %vm240, %v235, %v239
    %v242 = vmul.f32 %v234, %v241
    %v243 = vsub.f32 %v225, %v242
    %v244 = vmul.f32 %v243, %v243
    %v245 = vsel %vm227, %v244, 0.0
    %v246 = vrot.slane %v245, 4
    %v247 = vadd.f32 %v245, %v246
    %v248 = vrot.slane %v247, 2
    %v249 = vadd.f32 %v247, %v248
    %v250 = vrot.slane %v249, 1
    %v251 = vadd.f32 %v249, %v250
    %v252 = vmul.f32 %v251, %v241
    %v253 = vadd.f32 %v252, 1e-05
    %v254 = vrsqrt.pop %v253
    %v255 = vmul.f32 %v254, %v253
    %v256 = vmul.f32 %v255, %v254
    %v257 = vmul.f32 0.5, %v256
    %v258 = vsub.f32 1.5, %v257
    %v259 = vmul.f32 %v254, %v258
    %vm260 = vweird.f32 %v253
    %vm261 = vweird.f32 %v254
    %vm262 = vmor %vm260, %vm261
    %v263 = vsel %vm262, %v254, %v259
    %v264 = vmul.f32 %v243, %v263
    %266 = vrot.lane.b32.xlu0 %v90, 127
    %v267 = vpop.permute.xlu0 %266
    %v269 = vmul.f32 %v264, %v267
    %270 = vrot.lane.b32.xlu0 %v90, 126
    %v271 = vpop.permute.xlu0 %270
    %v273 = vadd.f32 %v269, %v271
    %v274 = vmax.f32 %v273, 0.0
    %275 = vrot.lane.b32.xlu0 %v90, 125
    %v276 = vpop.permute.xlu0 %275
    %v279 = vsel %vm97, %v89, 0
    %v282 = vsel %vm101, %v274, 0
    %284 = vmatpush.msra.mxu0 0.0
    %285 = vmatpush.msra.mxu0 0.0
    %286 = vmatpush.msra.mxu0 0.0
    %287 = vmatpush.msra.mxu0 0.0
    %288 = vmatpush.msra.mxu0 0.0
    %289 = vmatpush.msra.mxu0 0.0
    %290 = vmatpush.msra.mxu0 0.0
    %291 = vmatpush.msra.mxu0 0.0
    %292 = vmatpush.msra.mxu0 0.0
    %293 = vmatpush.msra.mxu0 0.0
    %294 = vmatpush.msra.mxu0 0.0
    %295 = vmatpush.msra.mxu0 0.0
    %296 = vmatpush.msra.mxu0 0.0
    %297 = vmatpush.msra.mxu0 0.0
    %298 = vmatpush.msra.mxu0 0.0
    %299 = vmatpush.msra.mxu0 %v282
    %300 = vmatmul.f32.gmra.mxu0 %v279
    %v301 = vpop.f32.mrf.mxu0
    %v302 = vadd.f32 %v276, %v301
    %303 = vdwg.mxu0
    %305 = vset.pattern.permute.xlu0 0
    %306 = vperm.xlu0 %305, %v302
    %v307 = vpop.permute.xlu0 %306
    %v309 = vunpack.c.l.s4 839922192
    %v310 = vunpack.c.0.s8 %v309
    %v311 = vperm.slane %v307, %v310
    %v313 = vadd.f32 %v92, %v311
    %v316 = vrot.slane %v124, 1
    %v317 = vrot.slane %v144, 1
    %320 = vrot.lane.b32.xlu0 %v316, 1
    %v321 = vpop.permute.xlu0 %320
    %322 = vrot.lane.b32.xlu0 %v317, 1
    %v323 = vpop.permute.xlu0 %322
    %v324 = vlaneseq
    %v325 = vand.u32 %v324, 127
    %vm326 = vcmp.lt.s32.totalorder %v325, 1
    %v327 = vsel %vm326, %v321, %v323
    %v328 = vsel %vm326, %v323, %v321
    %v331 = vrot.slane %v327, 4
    %v332 = vsel %vm101, %v328, %v331
    %v334 = vmul.f32 %v91, %v332
    %335 = vrot.lane.b32.xlu0 %v316, 127
    %v336 = vpop.permute.xlu0 %335
    %337 = vrot.lane.b32.xlu0 %v317, 127
    %v338 = vpop.permute.xlu0 %337
    %vm339 = vcmp.lt.s32.totalorder %v325, 127
    %v340 = vsel %vm339, %v336, %v338
    %v341 = vsel %vm339, %v338, %v336
    %v344 = vrot.slane %v341, 4
    %v345 = vsel %vm101, %v340, %v344
    %v346 = vrot.slane %v345, 7
    %v348 = vmul.f32 %v91, %v346
    %v350 = vrot.slane %v334, 7
    %v352 = vsub.f32 %v348, %v350
    %v353 = vmul.f32 %v124, 2.0
    %v354 = vmul.f32 %v144, 2.0
    %v357 = vrot.slane %v354, 4
    %v358 = vsel %vm101, %v353, %v357
    %v359 = vrot.slane %v358, 5
    %v360 = vrot.slane %v359, 4
    %v362 = vadd.f32 %v334, %v360
    %v364 = vrot.slane %v348, 5
    %v365 = vrot.slane %v364, 4
    %v367 = vadd.f32 %v362, %v365
    %v369 = vperm.slane %v352, 1
    %v370 = vperm.slane %v352, 5
    %373 = vrot.lane.b32.xlu0 %v369, 16
    %v374 = vpop.permute.xlu0 %373
    %375 = vrot.lane.b32.xlu0 %v370, 16
    %v376 = vpop.permute.xlu0 %375
    %vm377 = vcmp.lt.s32.totalorder %v325, 16
    %v378 = vsel %vm377, %v374, %v376
    %v379 = vsel %vm377, %v376, %v374
    %v382 = vrot.slane %v378, 4
    %v383 = vsel %vm101, %v379, %v382
    %v384 = vrot.slane %v383, 6
    %v386 = vmul.f32 %v91, %v384
    %v387 = vmul.f32 %v352, 2.0
    %v389 = vrot.slane %v387, 7
    %v391 = vadd.f32 %v386, %v389
    %392 = vrot.lane.b32.xlu0 %v369, 112
    %v393 = vpop.permute.xlu0 %392
    %394 = vrot.lane.b32.xlu0 %v370, 112
    %v395 = vpop.permute.xlu0 %394
    %vm396 = vcmp.lt.s32.totalorder %v325, 112
    %v397 = vsel %vm396, %v393, %v395
    %v398 = vsel %vm396, %v395, %v393
    %v401 = vrot.slane %v398, 4
    %v402 = vsel %vm101, %v397, %v401
    %v403 = vrot.slane %v402, 5
    %v405 = vmul.f32 %v91, %v403
    %v407 = vrot.slane %v405, 5
    %v408 = vrot.slane %v407, 4
    %v410 = vadd.f32 %v391, %v408
    %v412 = vperm.slane %v367, 0
    %v413 = vperm.slane %v367, 4
    %416 = vrot.lane.b32.xlu0 %v412, 112
    %v417 = vpop.permute.xlu0 %416
    %418 = vrot.lane.b32.xlu0 %v413, 112
    %v419 = vpop.permute.xlu0 %418
    %v420 = vsel %vm396, %v417, %v419
    %v421 = vsel %vm396, %v419, %v417
    %v424 = vrot.slane %v421, 4
    %v425 = vsel %vm101, %v420, %v424
    %v426 = vrot.slane %v425, 5
    %v428 = vmul.f32 %v91, %v426
    %429 = vrot.lane.b32.xlu0 %v412, 16
    %v430 = vpop.permute.xlu0 %429
    %431 = vrot.lane.b32.xlu0 %v413, 16
    %v432 = vpop.permute.xlu0 %431
    %v433 = vsel %vm377, %v430, %v432
    %v434 = vsel %vm377, %v432, %v430
    %v437 = vrot.slane %v433, 4
    %v438 = vsel %vm101, %v434, %v437
    %v439 = vrot.slane %v438, 6
    %v441 = vmul.f32 %v91, %v439
    %v443 = vrot.slane %v441, 7
    %v445 = vsub.f32 %v428, %v443
    %447 = vst [vmem:[#allocation1] ss:$2 sm:$0xff] %v313
    %v448 = vld.sshfl [vmem:[#allocation1] sm:$0xff pattern:$0x75316420]
    %v449 = vld.sshfl [vmem:[#allocation1 + $0x8] sm:$0xff pattern:$0x75316420]
    %452 = vst [vmem:[%s6] sm:$0xf] %v448
    %453 = vst [vmem:[%s6 + $0x8] sm:$0xf] %v449
    %v455 = vperm.slane %v410, 2
    %v456 = vperm.slane %v410, 6
    %v460 = vperm.slane %v445, 3
    %v461 = vperm.slane %v445, 7
    %v464 = vsel %vm149, %v455, %v460
    %v465 = vsel %vm149, %v456, %v461
    %v468 = vrot.slane %v464, 4
    %v469 = vrot.slane %v465, 4
    %472 = vst [vmem:[%s6] sm:$0x30] %v468
    %473 = vst [vmem:[%s6 + $0x8] sm:$0x30] %v469
    %s474 = scalar_lea.vmem [#allocation3], 8
    %v475 = vld [vmem:[%s474] sm:$0xff]
    %477 = vst [vmem:[#allocation1] ss:$2 sm:$0xff] %v475
    %v478 = vld.sshfl [vmem:[#allocation1] sm:$0xff pattern:$0x75316420]
    %v479 = vld.sshfl [vmem:[#allocation1 + $0x8] sm:$0xff pattern:$0x75316420]
    %v480 = vsel %vm101, %v478, 0
    %v482 = vsel %vm101, %v479, 0
    %484 = vmatpush.msra.mxu0 0.0
    %485 = vmatpush.msra.mxu0 0.0
    %486 = vmatpush.msra.mxu0 0.0
    %487 = vmatpush.msra.mxu0 0.0
    %488 = vmatpush.msra.mxu0 0.0
    %489 = vmatpush.msra.mxu0 0.0
    %490 = vmatpush.msra.mxu0 0.0
    %491 = vmatpush.msra.mxu0 0.0
    %492 = vmatpush.msra.mxu0 0.0
    %493 = vmatpush.msra.mxu0 0.0
    %494 = vmatpush.msra.mxu0 0.0
    %495 = vmatpush.msra.mxu0 0.0
    %496 = vmatpush.msra.mxu0 0.0
    %497 = vmatpush.msra.mxu0 0.0
    %498 = vmatpush.msra.mxu0 0.0
    %499 = vmatpush.msra.mxu0 %v480
    %500 = vmatmul.f32.gmra.mxu0 %v99
    %v501 = vpop.f32.mrf.mxu0
    %v502 = vadd.f32 0.0, %v501
    %503 = vdwg.mxu0
    %504 = vmatpush.msra.mxu0 0.0
    %505 = vmatpush.msra.mxu0 0.0
    %506 = vmatpush.msra.mxu0 0.0
    %507 = vmatpush.msra.mxu0 0.0
    %508 = vmatpush.msra.mxu0 0.0
    %509 = vmatpush.msra.mxu0 0.0
    %510 = vmatpush.msra.mxu0 0.0
    %511 = vmatpush.msra.mxu0 0.0
    %512 = vmatpush.msra.mxu0 0.0
    %513 = vmatpush.msra.mxu0 0.0
    %514 = vmatpush.msra.mxu0 0.0
    %515 = vmatpush.msra.mxu0 0.0
    %516 = vmatpush.msra.mxu0 0.0
    %517 = vmatpush.msra.mxu0 0.0
    %518 = vmatpush.msra.mxu0 0.0
    %519 = vmatpush.msra.mxu0 %v482
    %520 = vmatmul.f32.gmra.mxu0 %v99
    %v521 = vpop.f32.mrf.mxu0
    %v522 = vadd.f32 0.0, %v521
    %523 = vdwg.mxu0
    %v524 = vadd.f32 %v502, %v146
    %v525 = vadd.f32 %v522, %v146
    %v526 = vsel %vm149, %v524, -inf
    %v527 = vsel %vm149, %v525, -inf
    %v528 = vmax.f32 %v526, %v527
    %529 = vmax.xlane.f32.xlu0 %v528
    %v530 = vpop.xlane.xlu0 %529
    %v531 = vsub.f32 %v524, %v530
    %v532 = vsub.f32 %v525, %v530
    %v533 = vmul.f32 %v531, 1.442695
    %v534 = vpow.pop %v533
    %v535 = vmul.f32 %v532, 1.442695
    %v536 = vpow.pop %v535
    %v537 = vsel %vm149, %v534, 0.0
    %v538 = vsel %vm149, %v536, 0.0
    %v539 = vadd.f32 %v537, %v538
    %540 = vadd.xlane.f32.xlu0 %v539
    %v541 = vpop.xlane.xlu0 %540
    %v542 = vrcp.pop %v541
    %v543 = vmul.f32 %v541, %v542
    %v544 = vsub.f32 1.0, %v543
    %v545 = vmul.f32 %v542, %v544
    %v546 = vadd.f32 %v542, %v545
    %vm547 = vweird.f32 %v541
    %vm548 = vweird.f32 %v542
    %vm549 = vmor %vm547, %vm548
    %v550 = vsel %vm549, %v542, %v546
    %v551 = vand.u32 2147483647, %v541
    %vm552 = vcmp.eq.f32.partialorder %v551, 8.507059e+37
    %v553 = vand.u32 %v541, 2147483648
    %v554 = vor.u32 1.1754944e-38, %v553
    %v555 = vsel %vm552, %v554, %v550
    %v556 = vmul.f32 %v534, %v555
    %v557 = vmul.f32 %v536, %v555
    %v558 = vperm.slane %v556, 0
    %v559 = vperm.slane %v557, 0
    %v562 = vrot.slane %v559, 4
    %v563 = vsel %vm101, %v558, %v562
    %v565 = vmul.f32 %v475, %v563
    %567 = vst [vmem:[#allocation1] ss:$2 sm:$0xff] %v565
    %v568 = vld.sshfl [vmem:[#allocation1] sm:$0xff pattern:$0x75316420]
    %v569 = vld.sshfl [vmem:[#allocation1 + $0x8] sm:$0xff pattern:$0x75316420]
    %v572 = vsel %vm101, %v568, 0.0
    %v573 = vsel %vm101, %v569, 0.0
    %v574 = vadd.f32 %v572, %v573
    %575 = vadd.xlane.f32.xlu0 %v574
    %v576 = vpop.xlane.xlu0 %575
    %v578 = vsel %vm101, %v576, 0
    %580 = vmatpush.msra.mxu0 0.0
    %581 = vmatpush.msra.mxu0 0.0
    %582 = vmatpush.msra.mxu0 0.0
    %583 = vmatpush.msra.mxu0 0.0
    %584 = vmatpush.msra.mxu0 0.0
    %585 = vmatpush.msra.mxu0 0.0
    %586 = vmatpush.msra.mxu0 0.0
    %587 = vmatpush.msra.mxu0 0.0
    %588 = vmatpush.msra.mxu0 0.0
    %589 = vmatpush.msra.mxu0 0.0
    %590 = vmatpush.msra.mxu0 0.0
    %591 = vmatpush.msra.mxu0 0.0
    %592 = vmatpush.msra.mxu0 0.0
    %593 = vmatpush.msra.mxu0 0.0
    %594 = vmatpush.msra.mxu0 0.0
    %595 = vmatpush.msra.mxu0 %v578
    %596 = vmatmul.f32.gmra.mxu0 %v202
    %v597 = vpop.f32.mrf.mxu0
    %v598 = vadd.f32 %v90, %v597
    %599 = vdwg.mxu0
    %v600 = vsel %vm227, %v598, 0.0
    %v601 = vrot.slane %v600, 4
    %v602 = vadd.f32 %v600, %v601
    %v603 = vrot.slane %v602, 2
    %v604 = vadd.f32 %v602, %v603
    %v605 = vrot.slane %v604, 1
    %v606 = vadd.f32 %v604, %v605
    %v607 = vmul.f32 %v606, %v241
    %v608 = vsub.f32 %v598, %v607
    %v609 = vmul.f32 %v608, %v608
    %v610 = vsel %vm227, %v609, 0.0
    %v611 = vrot.slane %v610, 4
    %v612 = vadd.f32 %v610, %v611
    %v613 = vrot.slane %v612, 2
    %v614 = vadd.f32 %v612, %v613
    %v615 = vrot.slane %v614, 1
    %v616 = vadd.f32 %v614, %v615
    %v617 = vmul.f32 %v616, %v241
    %v618 = vadd.f32 %v617, 1e-05
    %v619 = vrsqrt.pop %v618
    %v620 = vmul.f32 %v619, %v618
    %v621 = vmul.f32 %v620, %v619
    %v622 = vmul.f32 0.5, %v621
    %v623 = vsub.f32 1.5, %v622
    %v624 = vmul.f32 %v619, %v623
    %vm625 = vweird.f32 %v618
    %vm626 = vweird.f32 %v619
    %vm627 = vmor %vm625, %vm626
    %v628 = vsel %vm627, %v619, %v624
    %v629 = vmul.f32 %v608, %v628
    %v630 = vmul.f32 %v629, %v267
    %v631 = vadd.f32 %v630, %v271
    %v632 = vmax.f32 %v631, 0.0
    %v634 = vsel %vm101, %v632, 0
    %636 = vmatpush.msra.mxu0 0.0
    %637 = vmatpush.msra.mxu0 0.0
    %638 = vmatpush.msra.mxu0 0.0
    %639 = vmatpush.msra.mxu0 0.0
    %640 = vmatpush.msra.mxu0 0.0
    %641 = vmatpush.msra.mxu0 0.0
    %642 = vmatpush.msra.mxu0 0.0
    %643 = vmatpush.msra.mxu0 0.0
    %644 = vmatpush.msra.mxu0 0.0
    %645 = vmatpush.msra.mxu0 0.0
    %646 = vmatpush.msra.mxu0 0.0
    %647 = vmatpush.msra.mxu0 0.0
    %648 = vmatpush.msra.mxu0 0.0
    %649 = vmatpush.msra.mxu0 0.0
    %650 = vmatpush.msra.mxu0 0.0
    %651 = vmatpush.msra.mxu0 %v634
    %652 = vmatmul.f32.gmra.mxu0 %v279
    %v653 = vpop.f32.mrf.mxu0
    %v654 = vadd.f32 %v276, %v653
    %655 = vdwg.mxu0
    %657 = vset.pattern.permute.xlu0 0
    %658 = vperm.xlu0 %657, %v654
    %v659 = vpop.permute.xlu0 %658
    %v661 = vunpack.c.l.s4 839922192
    %v662 = vunpack.c.0.s8 %v661
    %v663 = vperm.slane %v659, %v662
    %v665 = vadd.f32 %v475, %v663
    %v668 = vrot.slane %v502, 1
    %v669 = vrot.slane %v522, 1
    %672 = vrot.lane.b32.xlu0 %v668, 1
    %v673 = vpop.permute.xlu0 %672
    %674 = vrot.lane.b32.xlu0 %v669, 1
    %v675 = vpop.permute.xlu0 %674
    %v676 = vsel %vm326, %v673, %v675
    %v677 = vsel %vm326, %v675, %v673
    %v680 = vrot.slane %v676, 4
    %v681 = vsel %vm101, %v677, %v680
    %v683 = vmul.f32 %v91, %v681
    %684 = vrot.lane.b32.xlu0 %v668, 127
    %v685 = vpop.permute.xlu0 %684
    %686 = vrot.lane.b32.xlu0 %v669, 127
    %v687 = vpop.permute.xlu0 %686
    %v688 = vsel %vm339, %v685, %v687
    %v689 = vsel %vm339, %v687, %v685
    %v692 = vrot.slane %v689, 4
    %v693 = vsel %vm101, %v688, %v692
    %v694 = vrot.slane %v693, 7
    %v696 = vmul.f32 %v91, %v694
    %v698 = vrot.slane %v683, 7
    %v700 = vsub.f32 %v696, %v698
    %v701 = vmul.f32 %v502, 2.0
    %v702 = vmul.f32 %v522, 2.0
    %v705 = vrot.slane %v702, 4
    %v706 = vsel %vm101, %v701, %v705
    %v707 = vrot.slane %v706, 5
    %v708 = vrot.slane %v707, 4
    %v710 = vadd.f32 %v683, %v708
    %v712 = vrot.slane %v696, 5
    %v713 = vrot.slane %v712, 4
    %v715 = vadd.f32 %v710, %v713
    %v717 = vperm.slane %v700, 1
    %v718 = vperm.slane %v700, 5
    %721 = vrot.lane.b32.xlu0 %v717, 16
    %v722 = vpop.permute.xlu0 %721
    %723 = vrot.lane.b32.xlu0 %v718, 16
    %v724 = vpop.permute.xlu0 %723
    %v725 = vsel %vm377, %v722, %v724
    %v726 = vsel %vm377, %v724, %v722
    %v729 = vrot.slane %v725, 4
    %v730 = vsel %vm101, %v726, %v729
    %v731 = vrot.slane %v730, 6
    %v733 = vmul.f32 %v91, %v731
    %v734 = vmul.f32 %v700, 2.0
    %v736 = vrot.slane %v734, 7
    %v738 = vadd.f32 %v733, %v736
    %739 = vrot.lane.b32.xlu0 %v717, 112
    %v740 = vpop.permute.xlu0 %739
    %741 = vrot.lane.b32.xlu0 %v718, 112
    %v742 = vpop.permute.xlu0 %741
    %v743 = vsel %vm396, %v740, %v742
    %v744 = vsel %vm396, %v742, %v740
    %v747 = vrot.slane %v744, 4
    %v748 = vsel %vm101, %v743, %v747
    %v749 = vrot.slane %v748, 5
    %v751 = vmul.f32 %v91, %v749
    %v753 = vrot.slane %v751, 5
    %v754 = vrot.slane %v753, 4
    %v756 = vadd.f32 %v738, %v754
    %v758 = vperm.slane %v715, 0
    %v759 = vperm.slane %v715, 4
    %762 = vrot.lane.b32.xlu0 %v758, 112
    %v763 = vpop.permute.xlu0 %762
    %764 = vrot.lane.b32.xlu0 %v759, 112
    %v765 = vpop.permute.xlu0 %764
    %v766 = vsel %vm396, %v763, %v765
    %v767 = vsel %vm396, %v765, %v763
    %v770 = vrot.slane %v767, 4
    %v771 = vsel %vm101, %v766, %v770
    %v772 = vrot.slane %v771, 5
    %v774 = vmul.f32 %v91, %v772
    %775 = vrot.lane.b32.xlu0 %v758, 16
    %v776 = vpop.permute.xlu0 %775
    %777 = vrot.lane.b32.xlu0 %v759, 16
    %v778 = vpop.permute.xlu0 %777
    %v779 = vsel %vm377, %v776, %v778
    %v780 = vsel %vm377, %v778, %v776
    %v783 = vrot.slane %v779, 4
    %v784 = vsel %vm101, %v780, %v783
    %v785 = vrot.slane %v784, 6
    %v787 = vmul.f32 %v91, %v785
    %v789 = vrot.slane %v787, 7
    %v791 = vsub.f32 %v774, %v789
    %793 = vst [vmem:[#allocation1] ss:$2 sm:$0xff] %v665
    %v794 = vld.sshfl [vmem:[#allocation1] sm:$0xff pattern:$0x75316420]
    %v795 = vld.sshfl [vmem:[#allocation1 + $0x8] sm:$0xff pattern:$0x75316420]
    %s798 = scalar_lea.vmem %s6, 16
    %799 = vst [vmem:[%s798] sm:$0xf] %v794
    %800 = vst [vmem:[%s798 + $0x8] sm:$0xf] %v795
    %v802 = vperm.slane %v756, 2
    %v803 = vperm.slane %v756, 6
    %v807 = vperm.slane %v791, 3
    %v808 = vperm.slane %v791, 7
    %v811 = vsel %vm149, %v802, %v807
    %v812 = vsel %vm149, %v803, %v808
    %v815 = vrot.slane %v811, 4
    %v816 = vrot.slane %v812, 4
    %819 = vst [vmem:[%s798] sm:$0x30] %v815
    %820 = vst [vmem:[%s798 + $0x8] sm:$0x30] %v816
    // Predicated region
    $region42: #{tpu_custom_call.1} parent=1 // pred_check
      _
    $region43: #{tpu_custom_call.1} parent=1 // pred_check_branch
      %822 = sbr.rel (0) target = $region45
    $region44: #{tpu_custom_call.1} parent=1 // pred_region
      _
    $region45: #{tpu_custom_call.1} parent=1 // pred_fallthru
      _
    // Predicated region
    $region46: #{tpu_custom_call.1} parent=1 // pred_check
      _
    $region47: #{tpu_custom_call.1} parent=1 // pred_check_branch
      %824 = sbr.rel (0) target = $region49
    $region48: #{tpu_custom_call.1} parent=1 // pred_region
      _
    $region49: #{tpu_custom_call.1} parent=1 // pred_fallthru
      _
    %825 = vsyncpa [#allocation4], 1
    %826 = vsyncpa [#allocation6], 1
    %827 = vsyncpa [#allocation9], 1

</llo_original>
